<compile_context>
chip_gen: v7x
topology: tpu7x:2x2x1
jax: 0.10.0
libtpu: 0.0.40
codegen_flags: <defaults>
</compile_context>

<pallas_src>
import jax
import jax.numpy as jnp
from jax import lax
from jax.experimental import pallas as pl
from jax.experimental.pallas import tpu as pltpu

_LANES = 128


def _rotate_kernel(cs_ref, x_ref, o_ref):
    # cs_ref: SMEM (2,) = [cos(theta), sin(theta)] (precomputed in the wrapper).
    # x_ref / o_ref: VMEM tiles of shape (tile_rows, 128) in x's native dtype.
    c = cs_ref[0]
    s = cs_ref[1]

    x = x_ref[...].astype(jnp.float32)
    tc = x.shape[-1]  # 128 (static)

    # (1, 128) lane-parity mask broadcast in the selects (no full-tile iota).
    lane = lax.broadcasted_iota(jnp.int32, (1, tc), 1)
    is_even = (lane & 1) == 0
    coef = jnp.where(is_even, s, -s)                     # (1, 128) f32

    # In-pair partner via single in-vreg lane rotates (XLU; free under HBM bound).
    # Wrapped lanes are never selected: even lanes only read lane i+1 (last even
    # lane is 126), odd lanes only read lane i-1 (first odd lane is 1).
    from_right = pltpu.roll(x, tc - 1, axis=1)           # lane i <- x[(i+1) % tc]
    from_left = pltpu.roll(x, 1, axis=1)                 # lane i <- x[(i-1) % tc]
    partner = jnp.where(is_even, from_right, from_left)

    # even: c*x0 + s*x1 ; odd: c*x1 - s*x0   ==   x @ [[c, -s], [s, c]]
    o_ref[...] = (c * x + coef * partner).astype(o_ref.dtype)


def _round_up(a, b):
    return -(-a // b) * b


def net_trig_forward(theta, x, *, tile_rows=8192, min_grid_steps=4,
                     alias_input=False):
    """theta: (1,) float32 parameter; x: (..., 2) array.  Returns x @ R(theta)."""
    if x.shape[-1] != 2:
        raise ValueError("NetTrig expects trailing dim of 2")
    assert tile_rows % 32 == 0  # multiple of sublane packing for 8/16/32-bit dtypes

    orig_shape = x.shape
    dtype = x.dtype
    itemsize = jnp.dtype(dtype).itemsize
    n = x.size  # even (trailing dim is 2)

    # Hoist the transcendentals: computed once, passed as SMEM scalars.
    t = jnp.asarray(theta, jnp.float32).reshape(-1)[0]
    cs = jnp.stack([jnp.cos(t), jnp.sin(t)])  # (2,) float32

    # Lane-dense 2D view in the native dtype. (x0, x1) pairs stay interleaved
    # along the 128-lane axis (contiguous reshape is free). Pad only to a
    # multiple of 128 when needed.
    flat = x.reshape(-1)
    pad = (-n) % _LANES
    if pad:
        flat = jnp.pad(flat, (0, pad))
    rows = flat.size // _LANES
    x2d = flat.reshape(rows, _LANES)

    # Row tiling: big blocks to amortize per-step overhead, but guarantee a few
    # grid steps so the "parallel" axis can use both v7x TensorCores.
    sub_mult = {4: 8, 2: 16, 1: 32}.get(itemsize, 8)
    if rows < 2 * sub_mult:
        tr = rows                                        # single full-extent block
    else:
        tr = min(tile_rows, _round_up(pl.cdiv(rows, min_grid_steps), sub_mult))
        tr = min(tr, (rows // sub_mult) * sub_mult)
    grid_r = pl.cdiv(rows, tr)                           # partial edge block is masked

    out2d = pl.pallas_call(
        _rotate_kernel,
        out_shape=jax.ShapeDtypeStruct((rows, _LANES), dtype),
        grid=(grid_r,),
        in_specs=[
            pl.BlockSpec(memory_space=pltpu.SMEM),           # [cos t, sin t]
            pl.BlockSpec((tr, _LANES), lambda i: (i, 0)),    # x tile (VMEM)
        ],
        out_specs=pl.BlockSpec((tr, _LANES), lambda i: (i, 0)),
        compiler_params=pltpu.CompilerParams(
            dimension_semantics=("parallel",),
            vmem_limit_bytes=32 * 1024 * 1024),
        cost_estimate=pl.CostEstimate(
            flops=3 * rows * _LANES,
            bytes_accessed=2 * rows * _LANES * itemsize,
            transcendentals=0),
        # Footprint-only win (in-place update of the padded/reshaped buffer).
        input_output_aliases=({1: 0} if alias_input else {}),
    )(cs, x2d)

    out = out2d.reshape(-1)
    if pad:
        out = out[:n]
    return out.reshape(orig_shape)


def net_trig_reference(theta, x):
    # Elementwise form of x @ [[c, -s], [s, c]], computed in f32 like the kernel.
    t = jnp.asarray(theta, jnp.float32).reshape(-1)[0]
    c, s = jnp.cos(t), jnp.sin(t)
    xf = x.astype(jnp.float32)
    x0, x1 = xf[..., 0], xf[..., 1]
    y = jnp.stack([c * x0 + s * x1, -s * x0 + c * x1], axis=-1)
    return y.astype(x.dtype)


if __name__ == "__main__":
    key = jax.random.PRNGKey(0)

    fwd = jax.jit(net_trig_forward,
                  static_argnames=("tile_rows", "min_grid_steps", "alias_input"))

    # Parameter init matching nn.Parameter(torch.zeros(1)).
    theta0 = jnp.zeros((1,), dtype=jnp.float32)

    # Small input consistent with the forward: trailing dim must be 2.
    x_small = jax.random.normal(key, (2, 8, 2), dtype=jnp.float32)
    out = jax.block_until_ready(fwd(theta0, x_small))
    ref = net_trig_reference(theta0, x_small)
    assert out.shape == ref.shape and out.dtype == ref.dtype
    assert jnp.allclose(out, ref, atol=1e-6, rtol=1e-6)

    # Nonzero angle.
    theta1 = jnp.array([0.3], dtype=jnp.float32)
    out1 = jax.block_until_ready(fwd(theta1, x_small))
    assert jnp.allclose(out1, net_trig_reference(theta1, x_small),
                        atol=1e-5, rtol=1e-5)

    # Native bf16 path (no wrapper f32 round trip; f32 accumulate in-vregs only).
    key, k1, k2, k3 = jax.random.split(key, 4)
    x_bf16 = jax.random.normal(k1, (4, 96, 2), dtype=jnp.bfloat16)
    out_bf16 = jax.block_until_ready(fwd(theta1, x_bf16))
    assert out_bf16.dtype == jnp.bfloat16 and out_bf16.shape == x_bf16.shape
    assert jnp.allclose(out_bf16.astype(jnp.float32),
                        net_trig_reference(theta1, x_bf16).astype(jnp.float32),
                        atol=2e-2, rtol=2e-2)

    # Ragged lane-padding path (n not a multiple of 128).
    x_odd = jax.random.normal(k2, (5, 33, 2), dtype=jnp.float32)
    out_odd = jax.block_until_ready(fwd(theta1, x_odd))
    assert jnp.allclose(out_odd, net_trig_reference(theta1, x_odd),
                        atol=1e-5, rtol=1e-5)

    # Multi-block pipelined grid with a masked partial edge block (rows % tr != 0)
    # plus lane padding, and the optional input/output aliasing.
    x_med = jax.random.normal(k3, (2, 5200, 2), dtype=jnp.float32)
    out_med = jax.block_until_ready(
        fwd(theta1, x_med, tile_rows=32, alias_input=True))
    assert jnp.allclose(out_med, net_trig_reference(theta1, x_med),
                        atol=1e-5, rtol=1e-5)

    print("KERNEL_OK")
</pallas_src>

<mosaic_0001>
module attributes {stable_mosaic.version = 11 : i64} {
  func.func @_rotate_kernel(%arg0: i32, %arg1: memref<2xf32, #tpu.memory_space<smem>>, %arg2: memref<1x128xf32, #tpu.memory_space<vmem>>, %arg3: memref<1x128xf32, #tpu.memory_space<vmem>>) attributes {dimension_semantics = [#tpu.dimension_semantics<parallel>], iteration_bounds = array<i64: 1>, scalar_prefetch = 0 : i64, scratch_operands = 0 : i64, tpu.core_type = #tpu.core_type<tc>, window_params = [{transform_indices = @transform_0, window_bounds = array<i64: 2>}, {transform_indices = @transform_1, window_bounds = array<i64: 1, 128>}, {transform_indices = @transform_2, window_bounds = array<i64: 1, 128>}]} {
    %c0 = arith.constant 0 : index
    %0 = memref.load %arg1[%c0] : memref<2xf32, #tpu.memory_space<smem>>
    %c1 = arith.constant 1 : index
    %1 = memref.load %arg1[%c1] : memref<2xf32, #tpu.memory_space<smem>>
    %c0_0 = arith.constant 0 : index
    %c0_1 = arith.constant 0 : index
    %2 = vector.load %arg2[%c0_0, %c0_1] : memref<1x128xf32, #tpu.memory_space<vmem>>, vector<1x128xf32>
    %3 = tpu.iota {dimensions = array<i32: 1>} : vector<1x128xi32>
    %c1_i32 = arith.constant 1 : i32
    %4 = vector.broadcast %c1_i32 : i32 to vector<1x128xi32>
    %5 = arith.andi %3, %4 : vector<1x128xi32>
    %c0_i32 = arith.constant 0 : i32
    %6 = vector.broadcast %c0_i32 : i32 to vector<1x128xi32>
    %7 = arith.cmpi eq, %5, %6 : vector<1x128xi32>
    %cst = arith.constant 0.000000e+00 : f32
    %8 = arith.subf %cst, %1 : f32
    %9 = vector.broadcast %1 : f32 to vector<1x128xf32>
    %10 = vector.broadcast %8 : f32 to vector<1x128xf32>
    %11 = arith.select %7, %9, %10 : vector<1x128xi1>, vector<1x128xf32>
    %c127_i32 = arith.constant 127 : i32
    %12 = tpu.dynamic_rotate %2 by %c127_i32 dim 1 : vector<1x128xf32>, i32 -> vector<1x128xf32>
    %c1_i32_2 = arith.constant 1 : i32
    %13 = tpu.dynamic_rotate %2 by %c1_i32_2 dim 1 : vector<1x128xf32>, i32 -> vector<1x128xf32>
    %14 = arith.select %7, %12, %13 : vector<1x128xi1>, vector<1x128xf32>
    %15 = vector.broadcast %0 : f32 to vector<1x128xf32>
    %16 = arith.mulf %15, %2 : vector<1x128xf32>
    %17 = arith.mulf %11, %14 : vector<1x128xf32>
    %18 = arith.addf %16, %17 : vector<1x128xf32>
    %c0_3 = arith.constant 0 : index
    %c0_4 = arith.constant 0 : index
    %19 = vector.load %arg3[%c0_3, %c0_4] : memref<1x128xf32, #tpu.memory_space<vmem>>, vector<1x128xf32>
    tpu.vector_store %arg3[%c0_3, %c0_4], %18 {strides = array<i32>} : memref<1x128xf32, #tpu.memory_space<vmem>>, vector<1x128xf32>,
    return
  }
  func.func @transform_0(%arg0: i32) -> i32 {
    %c0_i32 = arith.constant 0 : i32
    %c0_i32_0 = arith.constant 0 : i32
    return %c0_i32 : i32
  }
  func.func @transform_1(%arg0: i32) -> (i32, i32) {
    %c0_i32 = arith.constant 0 : i32
    %c0_i32_0 = arith.constant 0 : i32
    return %arg0, %c0_i32 : i32, i32
  }
  func.func @transform_2(%arg0: i32) -> (i32, i32) {
    %c0_i32 = arith.constant 0 : i32
    %c0_i32_0 = arith.constant 0 : i32
    return %arg0, %c0_i32 : i32, i32
  }
}

</mosaic_0001>

<llo_original>
// kernel: net_trig_forward.1
$region0: #{net_trig_forward.1}
  #allocation0 [shape = 'u32[]', space=smem, size = 0x4, offset = 0x4, fixed_abs, tag = 'smem constant byte address 0x4 - core index']
  #allocation1 [shape = 'u32[144,128]{1,0:T(1,128)}', space=vmem, size = 0x12000, scoped, tag = 'internal scratch']
  %s0 = inlined_call_operand.vmem [shape: f32[2], index: 0, kind: input, shape index: {}]
  %s1 = inlined_call_operand.vmem [shape: f32[1,128], index: 1, kind: input, shape index: {}]
  %s2 = inlined_call_operand.vmem [shape: f32[1,128], index: 2, kind: output, shape index: {}]
  %s3 = sld [smem:[#allocation0]]
  $region22: #{net_trig_forward.1} parent=0
    _
  %s5 = ssub.s32 1, %s3
  %s6 = scalar_select 0, %s5, %s3
  $region1: #{net_trig_forward.1} parent=0
    #allocation2 [shape = 'u8[512]{0}', space=smem, size = 0x200, scoped, tag = 'input window, operand 0, single buffered']
    #allocation3 [shape = 's32[1]{0}', space=sflag, size = 0x4, scoped, tag = 'scoped memory for net_trig_forward.1']
    %7 = vsyncpa [#allocation3], 0
    // Predicated region
    $region2: #{net_trig_forward.1} parent=1 // pred_check
      _
    $region3: #{net_trig_forward.1} parent=1 // pred_check_branch
      %9 = sbr.rel (0) target = $region5
    $region4: #{net_trig_forward.1} parent=1 // pred_region
      %s11 = ssub.s32 16, 16
      %12 = vsyncadd [#allocation3], %s11
      %s14 = sshll.u32 %s0, 4
      %s15 = int_to_ptr.vmem [resolvable:$true] %s14
      %17 = dma.vmem_to_smem %s15, 16, [#allocation2], [#allocation3]
    $region5: #{net_trig_forward.1} parent=1 // pred_fallthru
      _
    // Predicated region
    $region6: #{net_trig_forward.1} parent=1 // pred_check
      _
    $region7: #{net_trig_forward.1} parent=1 // pred_check_branch
      %19 = sbr.rel (0) target = $region9
    $region8: #{net_trig_forward.1} parent=1 // pred_region
      _
    $region9: #{net_trig_forward.1} parent=1 // pred_fallthru
      _
    // Predicated region
    $region10: #{net_trig_forward.1} parent=1 // pred_check
      _
    $region11: #{net_trig_forward.1} parent=1 // pred_check_branch
      %21 = sbr.rel (0) target = $region13
    $region12: #{net_trig_forward.1} parent=1 // pred_region
      %22 = dma.done [#allocation3], 16
    $region13: #{net_trig_forward.1} parent=1 // pred_fallthru
      _
    %23 = sfence
    %s24 = sld [smem:[#allocation2]]
    %s25 = sld [smem:[#allocation2 + $0x1]]
    %v26 = vld [vmem:[%s1] sm:$0x1]
    %v27 = vlaneseq
    %v28 = vand.u32 %v27, 127
    %v29 = vand.u32 %v28, 1
    %vm30 = vcmp.eq.s32.totalorder %v29, 0
    %s31 = ssub.f32 0.0, %s25
    %v32 = vstv %s25
    %v33 = vstv %s31
    %v34 = vsel %vm30, %v32, %v33
    %35 = vrot.lane.b32.xlu0 %v26, 127
    %v36 = vpop.permute.xlu0 %35
    %37 = vrot.lane.b32.xlu0 %v26, 1
    %v38 = vpop.permute.xlu0 %37
    %v39 = vsel %vm30, %v36, %v38
    %v40 = vstv %s24
    %v41 = vmul.f32 %v40, %v26
    %v42 = vmul.f32 %v34, %v39
    %v43 = vadd.f32 %v41, %v42
    %44 = vst [vmem:[%s2] sm:$0x1] %v43
    // Predicated region
    $region14: #{net_trig_forward.1} parent=1 // pred_check
      _
    $region15: #{net_trig_forward.1} parent=1 // pred_check_branch
      %46 = sbr.rel (0) target = $region17
    $region16: #{net_trig_forward.1} parent=1 // pred_region
      _
    $region17: #{net_trig_forward.1} parent=1 // pred_fallthru
      _
    // Predicated region
    $region18: #{net_trig_forward.1} parent=1 // pred_check
      _
    $region19: #{net_trig_forward.1} parent=1 // pred_check_branch
      %48 = sbr.rel (0) target = $region21
    $region20: #{net_trig_forward.1} parent=1 // pred_region
      _
    $region21: #{net_trig_forward.1} parent=1 // pred_fallthru
      _
    %49 = vsyncpa [#allocation3], 1

</llo_original>
